<compile_context>
chip_gen: v6e
topology: v6e:2x2x1
jax: 0.10.0
libtpu: 0.0.40
codegen_flags: <defaults>
</compile_context>

<pallas_src>
import functools

import jax
import jax.numpy as jnp
from jax.experimental import pallas as pl
from jax.experimental.pallas import tpu as pltpu


_VMEM_LIMIT_BYTES = 32 * 1024 * 1024  # <= scoped/physical VMEM on v5e/v6e/v7x


def _round_up(x, m):
    return ((x + m - 1) // m) * m


def _pad2d(a, rows, cols):
    r, c = a.shape
    if rows == r and cols == c:
        return a
    return jnp.pad(a, ((0, rows - r), (0, cols - c)))


# ----------------------------------------------------------------------------
# Pallas kernels
# ----------------------------------------------------------------------------
def _matmul_bias_kernel(x_ref, w_ref, b_ref, o_ref, *, apply_relu):
    """o = (relu)(x @ w + b); x/w bf16 blocks, f32 accumulation on the MXU."""
    acc = jnp.dot(x_ref[...], w_ref[...], preferred_element_type=jnp.float32)
    acc = acc + b_ref[...]                       # (1, N) broadcasts over rows
    if apply_relu:
        acc = jnp.maximum(acc, 0.0)
    o_ref[...] = acc.astype(o_ref.dtype)


def _mlp2_kernel(x_ref, w1_ref, b1_ref, w2_ref, b2_ref, o_ref):
    """Fused FC tail: o = relu(x @ w1 + b1) @ w2 + b2 (both weights resident)."""
    h = jnp.dot(x_ref[...], w1_ref[...], preferred_element_type=jnp.float32)
    h = jnp.maximum(h + b1_ref[...], 0.0)
    acc = jnp.dot(h.astype(w2_ref.dtype), w2_ref[...],
                  preferred_element_type=jnp.float32)
    o_ref[...] = (acc + b2_ref[...]).astype(o_ref.dtype)


# ----------------------------------------------------------------------------
# Pallas wrappers (M-tiled grid, weights resident, lane-dense padded N)
# ----------------------------------------------------------------------------
def matmul_bias(x, w_p, b_p, true_n, *, apply_relu, block_m=256):
    """x: (M, K) f32/bf16.  w_p: (Kp, Np) bf16 pre-padded.  b_p: (1, Np) f32.
    Returns (M, true_n) f32."""
    M, K = x.shape
    Kp, Np = w_p.shape
    assert Kp >= K and Kp % 128 == 0 and Np % 128 == 0

    tm = min(block_m, _round_up(M, 8))
    Mp = _round_up(M, tm)
    x_p = _pad2d(x, Mp, Kp).astype(jnp.bfloat16)

    out = pl.pallas_call(
        functools.partial(_matmul_bias_kernel, apply_relu=apply_relu),
        out_shape=jax.ShapeDtypeStruct((Mp, Np), jnp.float32),
        grid=(Mp // tm,),
        in_specs=[
            pl.BlockSpec((tm, Kp), lambda i: (i, 0)),
            pl.BlockSpec((Kp, Np), lambda i: (0, 0)),   # weights resident
            pl.BlockSpec((1, Np), lambda i: (0, 0)),
        ],
        out_specs=pl.BlockSpec((tm, Np), lambda i: (i, 0)),
        compiler_params=pltpu.CompilerParams(
            dimension_semantics=("parallel",),
            vmem_limit_bytes=_VMEM_LIMIT_BYTES,
        ),
    )(x_p, w_p, b_p)
    return out[:M, :true_n]


def mlp2(x, w1_p, b1_p, w2_p, b2_p, true_n, *, block_m=256):
    """Fused fc1(relu)+fc2.  x: (M, K).  Returns (M, true_n) f32."""
    M, K = x.shape
    K1p, H = w1_p.shape
    Hw, Np = w2_p.shape
    assert Hw == H and K1p >= K

    tm = min(block_m, _round_up(M, 8))
    Mp = _round_up(M, tm)
    x_p = _pad2d(x, Mp, K1p).astype(jnp.bfloat16)

    out = pl.pallas_call(
        _mlp2_kernel,
        out_shape=jax.ShapeDtypeStruct((Mp, Np), jnp.float32),
        grid=(Mp // tm,),
        in_specs=[
            pl.BlockSpec((tm, K1p), lambda i: (i, 0)),
            pl.BlockSpec((K1p, H), lambda i: (0, 0)),
            pl.BlockSpec((1, H), lambda i: (0, 0)),
            pl.BlockSpec((H, Np), lambda i: (0, 0)),
            pl.BlockSpec((1, Np), lambda i: (0, 0)),
        ],
        out_specs=pl.BlockSpec((tm, Np), lambda i: (i, 0)),
        compiler_params=pltpu.CompilerParams(
            dimension_semantics=("parallel",),
            vmem_limit_bytes=_VMEM_LIMIT_BYTES,
        ),
    )(x_p, w1_p, b1_p, w2_p, b2_p)
    return out[:M, :true_n]


# ----------------------------------------------------------------------------
# im2col glue (XLA-side; NHWC in -> patch rows ordered (n, oh, ow),
# columns ordered (kh, kw, c) to match the weight-matrix layout below)
# ----------------------------------------------------------------------------
def _im2col_nhwc(x, kh, kw, stride, pad):
    n, h, w, c = x.shape
    xp = jnp.pad(x, ((0, 0), (pad, pad), (pad, pad), (0, 0)))
    ho = (h + 2 * pad - kh) // stride + 1
    wo = (w + 2 * pad - kw) // stride + 1
    cols = []
    for i in range(kh):
        for j in range(kw):
            cols.append(xp[:, i:i + stride * ho:stride, j:j + stride * wo:stride, :])
    p = jnp.stack(cols, axis=3)                  # (n, ho, wo, kh*kw, c)
    return p.reshape(n * ho * wo, kh * kw * c), ho, wo


def conv2d_pallas(x_nhwc, w_mat_p, b_p, out_ch, *, ksize, stride, pad, apply_relu):
    """Conv2d (PyTorch semantics) via im2col + Pallas matmul.  NHWC in/out."""
    n = x_nhwc.shape[0]
    patches, ho, wo = _im2col_nhwc(x_nhwc, ksize, ksize, stride, pad)
    out = matmul_bias(patches, w_mat_p, b_p, out_ch, apply_relu=apply_relu)
    return out.reshape(n, ho, wo, out_ch)


# ----------------------------------------------------------------------------
# Model
# ----------------------------------------------------------------------------
class DQNCNNPallas:
    def __init__(self, env_inputs, n_actions, key=None):
        if key is None:
            key = jax.random.PRNGKey(42)
        c, h, w = env_inputs
        self.num_actions = n_actions

        def conv_out(sz, k, s, p):
            return (sz + 2 * p - k) // s + 1

        h1, w1 = conv_out(h, 8, 4, 2), conv_out(w, 8, 4, 2)
        h2, w2 = conv_out(h1, 4, 2, 1), conv_out(w1, 4, 2, 1)
        h3, w3 = conv_out(h2, 3, 1, 1), conv_out(w2, 3, 1, 1)
        self.fc_input_dim = 64 * h3 * w3          # == _get_conv_output

        ks = jax.random.split(key, 10)

        def uinit(k, shape, fan_in):
            bound = 1.0 / float(fan_in) ** 0.5
            return jax.random.uniform(k, shape, jnp.float32, -bound, bound)

        # PyTorch-shaped parameters (deterministic synthetic init)
        conv1_w = uinit(ks[0], (32, c, 8, 8), c * 8 * 8)
        conv1_b = uinit(ks[1], (32,), c * 8 * 8)
        conv2_w = uinit(ks[2], (64, 32, 4, 4), 32 * 4 * 4)
        conv2_b = uinit(ks[3], (64,), 32 * 4 * 4)
        conv3_w = uinit(ks[4], (64, 64, 3, 3), 64 * 3 * 3)
        conv3_b = uinit(ks[5], (64,), 64 * 3 * 3)
        fc1_w = uinit(ks[6], (self.fc_input_dim, 512), self.fc_input_dim)  # rows in NCHW flatten order
        fc1_b = uinit(ks[7], (512,), self.fc_input_dim)
        fc2_w = uinit(ks[8], (512, n_actions), 512)
        fc2_b = uinit(ks[9], (n_actions,), 512)

        # --- one-time conversion to kernel layouts (bf16, 128-padded K/N) ---
        def prep_conv(wt, bt):
            oc, ic, kh_, kw_ = wt.shape
            # column order (kh, kw, ic) to match _im2col_nhwc
            w_mat = wt.transpose(2, 3, 1, 0).reshape(kh_ * kw_ * ic, oc)
            kp = _round_up(w_mat.shape[0], 128)
            np_ = _round_up(oc, 128)
            w_p = _pad2d(w_mat, kp, np_).astype(jnp.bfloat16)
            b_p = _pad2d(bt.astype(jnp.float32).reshape(1, oc), 1, np_)
            return w_p, b_p

        self.conv1_wp, self.conv1_bp = prep_conv(conv1_w, conv1_b)
        self.conv2_wp, self.conv2_bp = prep_conv(conv2_w, conv2_b)
        self.conv3_wp, self.conv3_bp = prep_conv(conv3_w, conv3_b)

        # fc1: permute rows from NCHW flatten order (c, h, w) -> NHWC (h, w, c)
        # so that NHWC activations flattened in-kernel match PyTorch .view(N,-1).
        fc1_w_nhwc = (fc1_w.reshape(64, h3, w3, 512)
                      .transpose(1, 2, 0, 3)
                      .reshape(self.fc_input_dim, 512))
        k1p = _round_up(self.fc_input_dim, 128)
        self.fc1_wp = _pad2d(fc1_w_nhwc, k1p, 512).astype(jnp.bfloat16)
        self.fc1_bp = fc1_b.astype(jnp.float32).reshape(1, 512)

        n2p = _round_up(n_actions, 128)
        self.fc2_wp = _pad2d(fc2_w, 512, n2p).astype(jnp.bfloat16)
        self.fc2_bp = _pad2d(fc2_b.astype(jnp.float32).reshape(1, n_actions), 1, n2p)

    def __call__(self, x_nchw):
        # Input follows PyTorch NCHW convention; convert once, then stay NHWC.
        x = jnp.transpose(x_nchw, (0, 2, 3, 1))
        y = conv2d_pallas(x, self.conv1_wp, self.conv1_bp, 32,
                          ksize=8, stride=4, pad=2, apply_relu=True)
        y = conv2d_pallas(y, self.conv2_wp, self.conv2_bp, 64,
                          ksize=4, stride=2, pad=1, apply_relu=True)
        y = conv2d_pallas(y, self.conv3_wp, self.conv3_bp, 64,
                          ksize=3, stride=1, pad=1, apply_relu=True)
        y = y.reshape(y.shape[0], -1)             # NHWC flatten (fc1 rows permuted to match)
        return mlp2(y, self.fc1_wp, self.fc1_bp, self.fc2_wp, self.fc2_bp,
                    self.num_actions)


if __name__ == "__main__":
    env_inputs = (4, 32, 32)   # (C, H, W); conv stack -> (4, 4, 64) -> fc_input_dim 1024
    n_actions = 6
    batch = 2

    key = jax.random.PRNGKey(0)
    x = jax.random.normal(key, (batch,) + env_inputs, dtype=jnp.float32)

    model = DQNCNNPallas(env_inputs, n_actions)
    out = model(x)
    out = jax.block_until_ready(out)

    assert out.shape == (batch, n_actions), out.shape
    assert bool(jnp.all(jnp.isfinite(out)))
    print("KERNEL_OK")
</pallas_src>

<mosaic_0001>
module attributes {stable_mosaic.version = 11 : i64} {
  func.func @_matmul_bias_kernel(%arg0: i32, %arg1: memref<128x256xbf16, #tpu.memory_space<vmem>>, %arg2: memref<256x128xbf16, #tpu.memory_space<vmem>>, %arg3: memref<1x128xf32, #tpu.memory_space<vmem>>, %arg4: memref<128x128xf32, #tpu.memory_space<vmem>>) attributes {dimension_semantics = [#tpu.dimension_semantics<parallel>], iteration_bounds = array<i64: 1>, scalar_prefetch = 0 : i64, scratch_operands = 0 : i64, tpu.core_type = #tpu.core_type<tc>, window_params = [{transform_indices = @transform_0, window_bounds = array<i64: 128, 256>}, {pipeline_mode = #tpu.pipeline_mode<synchronous>, transform_indices = @transform_1, window_bounds = array<i64: 256, 128>}, {pipeline_mode = #tpu.pipeline_mode<synchronous>, transform_indices = @transform_2, window_bounds = array<i64: 1, 128>}, {transform_indices = @transform_3, window_bounds = array<i64: 128, 128>}]} {
    %c0 = arith.constant 0 : index
    %c0_0 = arith.constant 0 : index
    %0 = vector.load %arg1[%c0, %c0_0] : memref<128x256xbf16, #tpu.memory_space<vmem>>, vector<128x256xbf16>
    %c0_1 = arith.constant 0 : index
    %c0_2 = arith.constant 0 : index
    %1 = vector.load %arg2[%c0_1, %c0_2] : memref<256x128xbf16, #tpu.memory_space<vmem>>, vector<256x128xbf16>
    %cst = arith.constant dense<0.000000e+00> : vector<128x128xf32>
    %2 = tpu.matmul %0, %1, %cst {dimension_numbers = #tpu.dot_dimension_numbers<[1], [0], [0], [1], [0, 0, 1, 1], [], []>} : vector<128x256xbf16>, vector<256x128xbf16>, vector<128x128xf32> -> vector<128x128xf32>
    %c0_3 = arith.constant 0 : index
    %c0_4 = arith.constant 0 : index
    %3 = vector.load %arg3[%c0_3, %c0_4] : memref<1x128xf32, #tpu.memory_space<vmem>>, vector<1x128xf32>
    %4 = vector.broadcast %3 : vector<1x128xf32> to vector<128x128xf32>
    %5 = arith.addf %2, %4 : vector<128x128xf32>
    %cst_5 = arith.constant 0.000000e+00 : f32
    %6 = vector.broadcast %cst_5 : f32 to vector<128x128xf32>
    %7 = arith.maximumf %5, %6 : vector<128x128xf32>
    %c0_6 = arith.constant 0 : index
    %c0_7 = arith.constant 0 : index
    %8 = vector.load %arg4[%c0_6, %c0_7] : memref<128x128xf32, #tpu.memory_space<vmem>>, vector<128x128xf32>
    tpu.vector_store %arg4[%c0_6, %c0_7], %7 {strides = array<i32>} : memref<128x128xf32, #tpu.memory_space<vmem>>, vector<128x128xf32>,
    return
  }
  func.func @transform_0(%arg0: i32) -> (i32, i32) {
    %c0_i32 = arith.constant 0 : i32
    %c0_i32_0 = arith.constant 0 : i32
    return %arg0, %c0_i32 : i32, i32
  }
  func.func @transform_1(%arg0: i32) -> (i32, i32) {
    %c0_i32 = arith.constant 0 : i32
    %c0_i32_0 = arith.constant 0 : i32
    %c0_i32_1 = arith.constant 0 : i32
    return %c0_i32, %c0_i32_0 : i32, i32
  }
  func.func @transform_2(%arg0: i32) -> (i32, i32) {
    %c0_i32 = arith.constant 0 : i32
    %c0_i32_0 = arith.constant 0 : i32
    %c0_i32_1 = arith.constant 0 : i32
    return %c0_i32, %c0_i32_0 : i32, i32
  }
  func.func @transform_3(%arg0: i32) -> (i32, i32) {
    %c0_i32 = arith.constant 0 : i32
    %c0_i32_0 = arith.constant 0 : i32
    return %arg0, %c0_i32 : i32, i32
  }
}

</mosaic_0001>

<llo_original>
// kernel: tpu_custom_call.1
$region0: #{tpu_custom_call.1}
  #allocation0 [shape = 'u32[]', space=smem, size = 0x4, offset = 0x4, fixed_abs, tag = 'smem constant byte address 0x4 - core index']
  #allocation1 [shape = 'u32[144,128]{1,0:T(1,128)}', space=vmem, size = 0x12000, scoped, tag = 'internal scratch']
  %s0 = inlined_call_operand.hbm [shape: bf16[128,256], index: 0, kind: input, shape index: {}]
  %s1 = inlined_call_operand.hbm [shape: bf16[256,128], index: 1, kind: input, shape index: {}]
  %s2 = inlined_call_operand.vmem [shape: f32[1,128], index: 2, kind: input, shape index: {}]
  %s3 = inlined_call_operand.hbm [shape: f32[128,128], index: 3, kind: output, shape index: {}]
  %s4 = sld [smem:[#allocation0]]
  $region30: #{tpu_custom_call.1} parent=0
    _
  %s6 = ssub.s32 1, %s4
  %s7 = scalar_select 0, %s6, %s4
  $region1: #{tpu_custom_call.1} parent=0
    #allocation2 [shape = 'u8[65536]{0}', space=vmem, size = 0x10000, scoped, tag = 'input window, operand 0, single buffered']
    #allocation3 [shape = 's32[1]{0}', space=sflag, size = 0x4, scoped, tag = 'scoped memory for tpu_custom_call.1']
    #allocation4 [shape = 's32[1]{0}', space=sflag, size = 0x4, scoped, tag = 'scoped memory for tpu_custom_call.1']
    #allocation5 [shape = 'u8[65536]{0}', space=vmem, size = 0x10000, scoped, tag = 'input window, operand 1, single buffered']
    #allocation6 [shape = 's32[1]{0}', space=sflag, size = 0x4, scoped, tag = 'scoped memory for tpu_custom_call.1']
    #allocation7 [shape = 'u8[65536]{0}', space=vmem, size = 0x10000, scoped, tag = 'output window, operand 0, single buffered']
    %8 = vsyncpa [#allocation3], 0
    %9 = vsyncpa [#allocation6], 0
    %10 = vsyncpa [#allocation4], 0
    // Predicated region
    $region2: #{tpu_custom_call.1} parent=1 // pred_check
      _
    $region3: #{tpu_custom_call.1} parent=1 // pred_check_branch
      %12 = sbr.rel (0) target = $region5
    $region4: #{tpu_custom_call.1} parent=1 // pred_region
      %s14 = ssub.s32 2048, 2048
      %15 = vsyncadd [#allocation3], %s14
      %s16 = sshll.u32 [#allocation2], 4
      %s17 = int_to_ptr.vmem [resolvable:$true] %s16
      %22 = dma.hbm_to_vmem [thread:$0]  %s0, 2048, %s17, [#allocation3], 128, 128, 8
    $region5: #{tpu_custom_call.1} parent=1 // pred_fallthru
      _
    // Predicated region
    $region6: #{tpu_custom_call.1} parent=1 // pred_check
      _
    $region7: #{tpu_custom_call.1} parent=1 // pred_check_branch
      %24 = sbr.rel (0) target = $region9
    $region8: #{tpu_custom_call.1} parent=1 // pred_region
      %s26 = ssub.s32 2048, 2048
      %27 = vsyncadd [#allocation6], %s26
      %s28 = sshll.u32 [#allocation5], 4
      %s29 = int_to_ptr.vmem [resolvable:$true] %s28
      %34 = dma.hbm_to_vmem [thread:$0]  %s1, 2048, %s29, [#allocation6], 64, 64, 4
    $region9: #{tpu_custom_call.1} parent=1 // pred_fallthru
      _
    // Predicated region
    $region10: #{tpu_custom_call.1} parent=1 // pred_check
      _
    $region11: #{tpu_custom_call.1} parent=1 // pred_check_branch
      %36 = sbr.rel (0) target = $region13
    $region12: #{tpu_custom_call.1} parent=1 // pred_region
      _
    $region13: #{tpu_custom_call.1} parent=1 // pred_fallthru
      _
    // Predicated region
    $region14: #{tpu_custom_call.1} parent=1 // pred_check
      _
    $region15: #{tpu_custom_call.1} parent=1 // pred_check_branch
      %38 = sbr.rel (0) target = $region17
    $region16: #{tpu_custom_call.1} parent=1 // pred_region
      %39 = dma.done [#allocation3], 2048
    $region17: #{tpu_custom_call.1} parent=1 // pred_fallthru
      _
    // Predicated region
    $region18: #{tpu_custom_call.1} parent=1 // pred_check
      _
    $region19: #{tpu_custom_call.1} parent=1 // pred_check_branch
      %41 = sbr.rel (0) target = $region21
    $region20: #{tpu_custom_call.1} parent=1 // pred_region
      %42 = dma.done [#allocation6], 2048
    $region21: #{tpu_custom_call.1} parent=1 // pred_fallthru
      _
    %v44 = vld [vmem:[#allocation2] sm:$0xff]
    %v45 = vld [vmem:[#allocation2 + $0x8] sm:$0xff]
    %v46 = vld [vmem:[#allocation2 + $0x10] sm:$0xff]
    %v47 = vld [vmem:[#allocation2 + $0x18] sm:$0xff]
    %v48 = vld [vmem:[#allocation2 + $0x20] sm:$0xff]
    %v49 = vld [vmem:[#allocation2 + $0x28] sm:$0xff]
    %v50 = vld [vmem:[#allocation2 + $0x30] sm:$0xff]
    %v51 = vld [vmem:[#allocation2 + $0x38] sm:$0xff]
    %v52 = vld [vmem:[#allocation2 + $0x40] sm:$0xff]
    %v53 = vld [vmem:[#allocation2 + $0x48] sm:$0xff]
    %v54 = vld [vmem:[#allocation2 + $0x50] sm:$0xff]
    %v55 = vld [vmem:[#allocation2 + $0x58] sm:$0xff]
    %v56 = vld [vmem:[#allocation2 + $0x60] sm:$0xff]
    %v57 = vld [vmem:[#allocation2 + $0x68] sm:$0xff]
    %v58 = vld [vmem:[#allocation2 + $0x70] sm:$0xff]
    %v59 = vld [vmem:[#allocation2 + $0x78] sm:$0xff]
    %v60 = vld [vmem:[#allocation5] sm:$0xf]
    %v61 = vld [vmem:[#allocation5 + $0x4] sm:$0xf]
    %v62 = vld [vmem:[#allocation5 + $0x8] sm:$0xf]
    %v63 = vld [vmem:[#allocation5 + $0xc] sm:$0xf]
    %v64 = vld [vmem:[#allocation5 + $0x10] sm:$0xf]
    %v65 = vld [vmem:[#allocation5 + $0x14] sm:$0xf]
    %v66 = vld [vmem:[#allocation5 + $0x18] sm:$0xf]
    %v67 = vld [vmem:[#allocation5 + $0x1c] sm:$0xf]
    %v68 = vld [vmem:[#allocation5 + $0x20] sm:$0xf]
    %v69 = vld [vmem:[#allocation5 + $0x24] sm:$0xf]
    %v70 = vld [vmem:[#allocation5 + $0x28] sm:$0xf]
    %v71 = vld [vmem:[#allocation5 + $0x2c] sm:$0xf]
    %v72 = vld [vmem:[#allocation5 + $0x30] sm:$0xf]
    %v73 = vld [vmem:[#allocation5 + $0x34] sm:$0xf]
    %v74 = vld [vmem:[#allocation5 + $0x38] sm:$0xf]
    %v75 = vld [vmem:[#allocation5 + $0x3c] sm:$0xf]
    %v76 = vld [vmem:[#allocation5 + $0x40] sm:$0xf]
    %v77 = vld [vmem:[#allocation5 + $0x44] sm:$0xf]
    %v78 = vld [vmem:[#allocation5 + $0x48] sm:$0xf]
    %v79 = vld [vmem:[#allocation5 + $0x4c] sm:$0xf]
    %v80 = vld [vmem:[#allocation5 + $0x50] sm:$0xf]
    %v81 = vld [vmem:[#allocation5 + $0x54] sm:$0xf]
    %v82 = vld [vmem:[#allocation5 + $0x58] sm:$0xf]
    %v83 = vld [vmem:[#allocation5 + $0x5c] sm:$0xf]
    %v84 = vld [vmem:[#allocation5 + $0x60] sm:$0xf]
    %v85 = vld [vmem:[#allocation5 + $0x64] sm:$0xf]
    %v86 = vld [vmem:[#allocation5 + $0x68] sm:$0xf]
    %v87 = vld [vmem:[#allocation5 + $0x6c] sm:$0xf]
    %v88 = vld [vmem:[#allocation5 + $0x70] sm:$0xf]
    %v89 = vld [vmem:[#allocation5 + $0x74] sm:$0xf]
    %v90 = vld [vmem:[#allocation5 + $0x78] sm:$0xf]
    %v91 = vld [vmem:[#allocation5 + $0x7c] sm:$0xf]
    %v92 = vld [vmem:[%s2] sm:$0x1]
    %v94 = vlaneseq
    %v95 = vshrl.u32 %v94, 7
    %v96 = vsub.s32 0, %v95
    %v97 = vrot.slane %v92, %v96
    %v115 = vunpack.c.l.b16 %v44
    %v116 = vunpack.c.h.b16 %v44
    %v117 = vunpack.c.l.b16 %v45
    %v118 = vunpack.c.h.b16 %v45
    %v119 = vunpack.c.l.b16 %v46
    %v120 = vunpack.c.h.b16 %v46
    %v121 = vunpack.c.l.b16 %v47
    %v122 = vunpack.c.h.b16 %v47
    %v123 = vunpack.c.l.b16 %v48
    %v124 = vunpack.c.h.b16 %v48
    %v125 = vunpack.c.l.b16 %v49
    %v126 = vunpack.c.h.b16 %v49
    %v127 = vunpack.c.l.b16 %v50
    %v128 = vunpack.c.h.b16 %v50
    %v129 = vunpack.c.l.b16 %v51
    %v130 = vunpack.c.h.b16 %v51
    %v131 = vunpack.c.l.b16 %v52
    %v132 = vunpack.c.h.b16 %v52
    %v133 = vunpack.c.l.b16 %v53
    %v134 = vunpack.c.h.b16 %v53
    %v135 = vunpack.c.l.b16 %v54
    %v136 = vunpack.c.h.b16 %v54
    %v137 = vunpack.c.l.b16 %v55
    %v138 = vunpack.c.h.b16 %v55
    %v139 = vunpack.c.l.b16 %v56
    %v140 = vunpack.c.h.b16 %v56
    %v141 = vunpack.c.l.b16 %v57
    %v142 = vunpack.c.h.b16 %v57
    %v143 = vunpack.c.l.b16 %v58
    %v144 = vunpack.c.h.b16 %v58
    %v145 = vunpack.c.l.b16 %v59
    %v146 = vunpack.c.h.b16 %v59
    %v147 = vpack.c.b16 %v117, %v115
    %v148 = vpack.c.b16 %v118, %v116
    %v149 = vpack.c.b16 %v121, %v119
    %v150 = vpack.c.b16 %v122, %v120
    %v151 = vpack.c.b16 %v125, %v123
    %v152 = vpack.c.b16 %v126, %v124
    %v153 = vpack.c.b16 %v129, %v127
    %v154 = vpack.c.b16 %v130, %v128
    %v155 = vpack.c.b16 %v133, %v131
    %v156 = vpack.c.b16 %v134, %v132
    %v157 = vpack.c.b16 %v137, %v135
    %v158 = vpack.c.b16 %v138, %v136
    %v159 = vpack.c.b16 %v141, %v139
    %v160 = vpack.c.b16 %v142, %v140
    %v161 = vpack.c.b16 %v145, %v143
    %v162 = vpack.c.b16 %v146, %v144
    %v211 = vunpack.c.l.b16 %v60
    %v212 = vunpack.c.l.b16 %v61
    %v213 = vunpack.c.l.b16 %v62
    %v214 = vunpack.c.l.b16 %v63
    %v215 = vunpack.c.l.b16 %v64
    %v216 = vunpack.c.l.b16 %v65
    %v217 = vunpack.c.l.b16 %v66
    %v218 = vunpack.c.l.b16 %v67
    %v219 = vunpack.c.l.b16 %v68
    %v220 = vunpack.c.l.b16 %v69
    %v221 = vunpack.c.l.b16 %v70
    %v222 = vunpack.c.l.b16 %v71
    %v223 = vunpack.c.l.b16 %v72
    %v224 = vunpack.c.l.b16 %v73
    %v225 = vunpack.c.l.b16 %v74
    %v226 = vunpack.c.l.b16 %v75
    %v227 = vunpack.c.l.b16 %v76
    %v228 = vunpack.c.l.b16 %v77
    %v229 = vunpack.c.l.b16 %v78
    %v230 = vunpack.c.l.b16 %v79
    %v231 = vunpack.c.l.b16 %v80
    %v232 = vunpack.c.l.b16 %v81
    %v233 = vunpack.c.l.b16 %v82
    %v234 = vunpack.c.l.b16 %v83
    %v235 = vunpack.c.l.b16 %v84
    %v236 = vunpack.c.l.b16 %v85
    %v237 = vunpack.c.l.b16 %v86
    %v238 = vunpack.c.l.b16 %v87
    %v239 = vunpack.c.l.b16 %v88
    %v240 = vunpack.c.l.b16 %v89
    %v241 = vunpack.c.l.b16 %v90
    %v242 = vunpack.c.l.b16 %v91
    %v243 = vpack.c.b16 %v212, %v211
    %v244 = vpack.c.b16 %v214, %v213
    %v245 = vpack.c.b16 %v216, %v215
    %v246 = vpack.c.b16 %v218, %v217
    %v247 = vpack.c.b16 %v220, %v219
    %v248 = vpack.c.b16 %v222, %v221
    %v249 = vpack.c.b16 %v224, %v223
    %v250 = vpack.c.b16 %v226, %v225
    %v251 = vpack.c.b16 %v228, %v227
    %v252 = vpack.c.b16 %v230, %v229
    %v253 = vpack.c.b16 %v232, %v231
    %v254 = vpack.c.b16 %v234, %v233
    %v255 = vpack.c.b16 %v236, %v235
    %v256 = vpack.c.b16 %v238, %v237
    %v257 = vpack.c.b16 %v240, %v239
    %v258 = vpack.c.b16 %v242, %v241
    %275 = vmatprep.subr.bf16.mxu0 0
    %276 = vmatpush1.bf16.msra.mxu0 %v250
    %277 = vmatprep.subr.bf16.mxu0 0
    %278 = vmatpush1.bf16.msra.mxu0 %v249
    %279 = vmatprep.subr.bf16.mxu0 0
    %280 = vmatpush1.bf16.msra.mxu0 %v248
    %281 = vmatprep.subr.bf16.mxu0 0
    %282 = vmatpush1.bf16.msra.mxu0 %v247
    %283 = vmatprep.subr.bf16.mxu0 0
    %284 = vmatpush1.bf16.msra.mxu0 %v246
    %285 = vmatprep.subr.bf16.mxu0 0
    %286 = vmatpush1.bf16.msra.mxu0 %v245
    %287 = vmatprep.subr.bf16.mxu0 0
    %288 = vmatpush1.bf16.msra.mxu0 %v244
    %289 = vmatprep.subr.bf16.mxu0 0
    %290 = vmatpush1.bf16.msra.mxu0 %v243
    %291 = vmatprep.subr.bf16.mxu0 0
    %292 = vmatpush2.bf16.msra.mxu0 %v258
    %293 = vmatprep.subr.bf16.mxu0 0
    %294 = vmatpush2.bf16.msra.mxu0 %v257
    %295 = vmatprep.subr.bf16.mxu0 0
    %296 = vmatpush2.bf16.msra.mxu0 %v256
    %297 = vmatprep.subr.bf16.mxu0 0
    %298 = vmatpush2.bf16.msra.mxu0 %v255
    %299 = vmatprep.subr.bf16.mxu0 0
    %300 = vmatpush2.bf16.msra.mxu0 %v254
    %301 = vmatprep.subr.bf16.mxu0 0
    %302 = vmatpush2.bf16.msra.mxu0 %v253
    %303 = vmatprep.subr.bf16.mxu0 0
    %304 = vmatpush2.bf16.msra.mxu0 %v252
    %305 = vmatprep.subr.bf16.mxu0 0
    %306 = vmatpush2.bf16.msra.mxu0 %v251
    %307 = vmatprep.mubr.bf16.mxu0 %v148
    %308 = vmatmul.mubr.bf16.gmra.mxu0 %v147
    %v309 = vpop.f32.mrf.mxu0
    %v310 = vadd.f32 %v97, %v309
    %v311 = vpop.f32.mrf.mxu0
    %v312 = vpop.f32.mrf.mxu0
    %v313 = vadd.f32 %v97, %v312
    %v314 = vpop.f32.mrf.mxu0
    %315 = vmatprep.mubr.bf16.mxu0 %v150
    %316 = vmatmul.mubr.bf16.gmra.mxu0 %v149
    %v317 = vpop.f32.mrf.mxu0
    %v318 = vadd.f32 %v97, %v317
    %v319 = vpop.f32.mrf.mxu0
    %v320 = vpop.f32.mrf.mxu0
    %v321 = vadd.f32 %v97, %v320
    %v322 = vpop.f32.mrf.mxu0
    %323 = vmatprep.mubr.bf16.mxu0 %v152
    %324 = vmatmul.mubr.bf16.gmra.mxu0 %v151
    %v325 = vpop.f32.mrf.mxu0
    %v326 = vadd.f32 %v97, %v325
    %v327 = vpop.f32.mrf.mxu0
    %v328 = vpop.f32.mrf.mxu0
    %v329 = vadd.f32 %v97, %v328
    %v330 = vpop.f32.mrf.mxu0
    %331 = vmatprep.mubr.bf16.mxu0 %v154
    %332 = vmatmul.mubr.bf16.gmra.mxu0 %v153
    %v333 = vpop.f32.mrf.mxu0
    %v334 = vadd.f32 %v97, %v333
    %v335 = vpop.f32.mrf.mxu0
    %v336 = vpop.f32.mrf.mxu0
    %v337 = vadd.f32 %v97, %v336
    %v338 = vpop.f32.mrf.mxu0
    %339 = vmatprep.mubr.bf16.mxu0 %v156
    %340 = vmatmul.mubr.bf16.gmra.mxu0 %v155
    %v341 = vpop.f32.mrf.mxu0
    %v342 = vadd.f32 %v97, %v341
    %v343 = vpop.f32.mrf.mxu0
    %v344 = vpop.f32.mrf.mxu0
    %v345 = vadd.f32 %v97, %v344
    %v346 = vpop.f32.mrf.mxu0
    %347 = vmatprep.mubr.bf16.mxu0 %v158
    %348 = vmatmul.mubr.bf16.gmra.mxu0 %v157
    %v349 = vpop.f32.mrf.mxu0
    %v350 = vadd.f32 %v97, %v349
    %v351 = vpop.f32.mrf.mxu0
    %v352 = vpop.f32.mrf.mxu0
    %v353 = vadd.f32 %v97, %v352
    %v354 = vpop.f32.mrf.mxu0
    %355 = vmatprep.mubr.bf16.mxu0 %v160
    %356 = vmatmul.mubr.bf16.gmra.mxu0 %v159
    %v357 = vpop.f32.mrf.mxu0
    %v358 = vadd.f32 %v97, %v357
    %v359 = vpop.f32.mrf.mxu0
    %v360 = vpop.f32.mrf.mxu0
    %v361 = vadd.f32 %v97, %v360
    %v362 = vpop.f32.mrf.mxu0
    %363 = vmatprep.mubr.bf16.mxu0 %v162
    %364 = vmatmul.mubr.bf16.gmra.mxu0 %v161
    %v365 = vpop.f32.mrf.mxu0
    %v366 = vadd.f32 %v97, %v365
    %v367 = vpop.f32.mrf.mxu0
    %v368 = vpop.f32.mrf.mxu0
    %v369 = vadd.f32 %v97, %v368
    %v370 = vpop.f32.mrf.mxu0
    %371 = vdwg.mxu0
    %v372 = vmax.f32 %v310, 0.0
    %v373 = vmax.f32 %v313, 0.0
    %v374 = vmax.f32 %v318, 0.0
    %v375 = vmax.f32 %v321, 0.0
    %v376 = vmax.f32 %v326, 0.0
    %v377 = vmax.f32 %v329, 0.0
    %v378 = vmax.f32 %v334, 0.0
    %v379 = vmax.f32 %v337, 0.0
    %v380 = vmax.f32 %v342, 0.0
    %v381 = vmax.f32 %v345, 0.0
    %v382 = vmax.f32 %v350, 0.0
    %v383 = vmax.f32 %v353, 0.0
    %v384 = vmax.f32 %v358, 0.0
    %v385 = vmax.f32 %v361, 0.0
    %v386 = vmax.f32 %v366, 0.0
    %v387 = vmax.f32 %v369, 0.0
    %388 = vst [vmem:[#allocation7] sm:$0xff] %v372
    %389 = vst [vmem:[#allocation7 + $0x8] sm:$0xff] %v373
    %390 = vst [vmem:[#allocation7 + $0x10] sm:$0xff] %v374
    %391 = vst [vmem:[#allocation7 + $0x18] sm:$0xff] %v375
    %392 = vst [vmem:[#allocation7 + $0x20] sm:$0xff] %v376
    %393 = vst [vmem:[#allocation7 + $0x28] sm:$0xff] %v377
    %394 = vst [vmem:[#allocation7 + $0x30] sm:$0xff] %v378
    %395 = vst [vmem:[#allocation7 + $0x38] sm:$0xff] %v379
    %396 = vst [vmem:[#allocation7 + $0x40] sm:$0xff] %v380
    %397 = vst [vmem:[#allocation7 + $0x48] sm:$0xff] %v381
    %398 = vst [vmem:[#allocation7 + $0x50] sm:$0xff] %v382
    %399 = vst [vmem:[#allocation7 + $0x58] sm:$0xff] %v383
    %400 = vst [vmem:[#allocation7 + $0x60] sm:$0xff] %v384
    %401 = vst [vmem:[#allocation7 + $0x68] sm:$0xff] %v385
    %402 = vst [vmem:[#allocation7 + $0x70] sm:$0xff] %v386
    %403 = vst [vmem:[#allocation7 + $0x78] sm:$0xff] %v387
    // Predicated region
    $region22: #{tpu_custom_call.1} parent=1 // pred_check
      _
    $region23: #{tpu_custom_call.1} parent=1 // pred_check_branch
      %405 = sbr.rel (0) target = $region25
    $region24: #{tpu_custom_call.1} parent=1 // pred_region
      %s407 = ssub.s32 2048, 2048
      %408 = vsyncadd [#allocation4], %s407
      %s409 = sshll.u32 [#allocation7], 4
      %s410 = int_to_ptr.vmem [resolvable:$true] %s409
      %415 = dma.vmem_to_hbm [thread:$0]  %s410, 2048, %s3, [#allocation4], 128, 128, 8
    $region25: #{tpu_custom_call.1} parent=1 // pred_fallthru
      _
    // Predicated region
    $region26: #{tpu_custom_call.1} parent=1 // pred_check
      _
    $region27: #{tpu_custom_call.1} parent=1 // pred_check_branch
      %417 = sbr.rel (0) target = $region29
    $region28: #{tpu_custom_call.1} parent=1 // pred_region
      %418 = dma.done [#allocation4], 2048
    $region29: #{tpu_custom_call.1} parent=1 // pred_fallthru
      _
    %419 = vsyncpa [#allocation3], 1
    %420 = vsyncpa [#allocation6], 1
    %421 = vsyncpa [#allocation4], 1

</llo_original>
